<compile_context>
chip_gen: v7x
topology: tpu7x:2x2x1
jax: 0.10.0
libtpu: 0.0.40
codegen_flags: <defaults>
</compile_context>

<pallas_src>
import numpy as np
import jax
import jax.numpy as jnp
from jax.experimental import pallas as pl
from jax.experimental.pallas import tpu as pltpu


def _round_up(x, m):
    return ((x + m - 1) // m) * m


# ---------------- parameter construction (host-side numpy, deterministic) ----
def get_projection_matrices(N):
    Q = np.arange(N, dtype=np.float64)
    R = (2 * Q + 1)[:, None]
    j, i = np.meshgrid(Q, Q)
    A = np.where(i < j, -1, (-1.0) ** (i - j + 1)) * R
    B = (-1.0) ** Q[:, None] * R
    return A, B


def bilinear_discretize(A, B, dt):
    # Equivalent of scipy.signal.cont2discrete((A,B,C,D), dt, method="bilinear").
    N = A.shape[0]
    I = np.eye(N)
    ima = I - (dt / 2.0) * A
    Ad = np.linalg.solve(ima, I + (dt / 2.0) * A)
    Bd = np.linalg.solve(ima, dt * B)
    return Ad, Bd


def build_block_operators(Ad, Bd, T):
    """Host precompute (float64 accumulation) of the per-block operators.

    P[k*N+n, n'] = (A^{k+1})[n, n']          -> block carry term   P @ c0
    G[k*N+n, j]  = (A^{k-j} B)[n] for j<=k   -> block drive term   G @ f_blk
    """
    Ad = np.asarray(Ad, np.float64)
    Bd = np.asarray(Bd, np.float64).reshape(-1)
    N = Ad.shape[0]
    pows = [np.eye(N)]
    for _ in range(T):
        pows.append(pows[-1] @ Ad)
    pows = np.stack(pows)                                 # (T+1, N, N)
    P = pows[1:T + 1].reshape(T * N, N)                   # (T*N, N)
    W = pows[:T] @ Bd                                     # (T, N): W[d] = A^d B
    d = np.arange(T)[:, None] - np.arange(T)[None, :]     # (k, j) -> k - j
    G = np.where((d >= 0)[:, :, None], W[np.clip(d, 0, None)], 0.0)  # (T, T, N)
    G = np.transpose(G, (0, 2, 1)).reshape(T * N, T)      # (T*N, T)
    return P.astype(np.float32), G.astype(np.float32)


# ---------------- Pallas kernel ----------------------------------------------
def lpu_block_kernel(x_ref, p_ref, g_ref, out_ref, c_ref):
    # x_ref:   (T, MT)    inputs for this time block (lanes = padded B*C rows)
    # p_ref:   (T*N, N)   stacked powers A^{k+1}               (VMEM resident)
    # g_ref:   (T*N, T)   causal input-response operator       (VMEM resident)
    # out_ref: (T*N, MT)  coefficients; row (k*N + n) = poly n at local step k
    # c_ref:   (N, MT)    carried recurrent state across time blocks (scratch)
    n_poly = c_ref.shape[0]

    @pl.when(pl.program_id(1) == 0)
    def _():
        c_ref[...] = jnp.zeros_like(c_ref)

    blk = (
        jnp.dot(p_ref[...], c_ref[...], preferred_element_type=jnp.float32)
        + jnp.dot(g_ref[...], x_ref[...], preferred_element_type=jnp.float32)
    )
    out_ref[...] = blk
    c_ref[...] = blk[-n_poly:]          # c_{T-1}: initial state for next block


# ---------------- wrapper -----------------------------------------------------
def legendre_projection_forward(x, Ad, Bd, *, time_tile=128):
    """x: (B, L, C) float32; Ad: (N, N); Bd: (N,).  Returns (B, C, N, L)."""
    Ad = np.asarray(Ad)
    Bd = np.asarray(Bd).reshape(-1)
    Bsz, L, C = x.shape
    N = Ad.shape[0]
    M = Bsz * C
    LANE = 128

    # --- tile sizes ----------------------------------------------------------
    T = _round_up(min(time_tile, _round_up(L, 8)), 8)    # timesteps per block
    L_pad = _round_up(L, T)
    M_pad = _round_up(M, LANE)
    MT = LANE
    for cand in (512, 256, 128):                         # biggest lane tile
        if M_pad % cand == 0:
            MT = cand
            break
    num_m = M_pad // MT
    num_t = L_pad // T

    # --- host precompute of block operators ----------------------------------
    P_np, G_np = build_block_operators(Ad, Bd, T)
    P = jnp.asarray(P_np)                                # (T*N, N)
    G = jnp.asarray(G_np)                                # (T*N, T)

    # --- layout: time-major, series (B*C) on the lane axis --------------------
    x_k = jnp.transpose(x, (1, 0, 2)).reshape(L, M).astype(jnp.float32)
    x_k = jnp.pad(x_k, ((0, L_pad - L), (0, M_pad - M)))

    out = pl.pallas_call(
        lpu_block_kernel,
        out_shape=jax.ShapeDtypeStruct((L_pad * N, M_pad), jnp.float32),
        grid_spec=pltpu.PrefetchScalarGridSpec(
            num_scalar_prefetch=0,
            grid=(num_m, num_t),
            in_specs=[
                pl.BlockSpec((T, MT), lambda m, t: (t, m)),       # f block
                pl.BlockSpec((T * N, N), lambda m, t: (0, 0)),    # P (resident)
                pl.BlockSpec((T * N, T), lambda m, t: (0, 0)),    # G (resident)
            ],
            out_specs=pl.BlockSpec((T * N, MT), lambda m, t: (t, m)),
            scratch_shapes=[pltpu.VMEM((N, MT), jnp.float32)],
        ),
        compiler_params=pltpu.CompilerParams(
            dimension_semantics=("parallel", "arbitrary"),
            vmem_limit_bytes=32 * 1024 * 1024,
        ),
    )(x_k, P, G)

    # (L_pad*N, M_pad) -> (L, N, B, C) -> (B, C, N, L)  (== torch permute(1,2,3,0))
    out = out.reshape(L_pad, N, M_pad)[:L, :, :M].reshape(L, N, Bsz, C)
    return jnp.transpose(out, (2, 3, 1, 0))


# ---------------- pure-JAX reference (for sanity check) ----------------------
def reference_forward(x, Ad, Bd):
    def step(c, f):
        c_new = c @ Ad.T + f[..., None] * Bd
        return c_new, c_new

    c0 = jnp.zeros((x.shape[0], x.shape[2], Ad.shape[0]), jnp.float32)
    xs = jnp.transpose(x, (1, 0, 2))        # (L, B, C)
    _, cs = jax.lax.scan(step, c0, xs)      # (L, B, C, N)
    return jnp.transpose(cs, (1, 2, 3, 0))  # (B, C, N, L)


# ---------------- main --------------------------------------------------------
if __name__ == "__main__":
    # module config (synthetic, deterministic, small)
    N = 8
    dt = 1.0 / 512
    Bsz, L, C = 2, 100, 4

    A_cont, B_cont = get_projection_matrices(N)
    Ad64, Bd64 = bilinear_discretize(A_cont, B_cont, dt)
    Ad = Ad64.astype(np.float32)                 # match module's f32 buffers
    Bd = Bd64.squeeze(-1).astype(np.float32)     # (N,)
    # TODO(synk): eval_matrix / reconstruct() are not part of forward() and are
    # not implemented here.

    key = jax.random.PRNGKey(0)
    x = jax.random.normal(key, (Bsz, L, C), dtype=jnp.float32)

    ref = reference_forward(x, jnp.asarray(Ad), jnp.asarray(Bd))

    # Multi-block path: T=32 -> 4 time blocks, padded L, carried state across
    # blocks, padded lane axis (M=8 -> 128).
    out = legendre_projection_forward(x, Ad, Bd, time_tile=32)
    out = jax.block_until_ready(out)
    assert out.shape == (Bsz, C, N, L), out.shape
    assert jnp.allclose(out, ref, atol=2e-4, rtol=2e-4), float(
        jnp.max(jnp.abs(out - ref)))

    # Single-block path (default tile >= L).
    out2 = jax.block_until_ready(legendre_projection_forward(x, Ad, Bd))
    assert jnp.allclose(out2, ref, atol=2e-4, rtol=2e-4), float(
        jnp.max(jnp.abs(out2 - ref)))

    print("KERNEL_OK")
</pallas_src>

<mosaic_0001>
module attributes {stable_mosaic.version = 11 : i64} {
  func.func @lpu_block_kernel(%arg0: i32, %arg1: i32, %arg2: memref<32x128xf32, #tpu.memory_space<vmem>>, %arg3: memref<256x8xf32, #tpu.memory_space<vmem>>, %arg4: memref<256x32xf32, #tpu.memory_space<vmem>>, %arg5: memref<256x128xf32, #tpu.memory_space<vmem>>, %arg6: memref<8x128xf32, #tpu.memory_space<vmem>>) attributes {dimension_semantics = [#tpu.dimension_semantics<parallel>, #tpu.dimension_semantics<arbitrary>], iteration_bounds = array<i64: 1, 4>, scalar_prefetch = 0 : i64, scratch_operands = 1 : i64, tpu.core_type = #tpu.core_type<tc>, window_params = [{transform_indices = @transform_0, window_bounds = array<i64: 32, 128>}, {pipeline_mode = #tpu.pipeline_mode<synchronous>, transform_indices = @transform_1, window_bounds = array<i64: 256, 8>}, {pipeline_mode = #tpu.pipeline_mode<synchronous>, transform_indices = @transform_2, window_bounds = array<i64: 256, 32>}, {transform_indices = @transform_3, window_bounds = array<i64: 256, 128>}]} {
    %c0_i32 = arith.constant 0 : i32
    %0 = arith.cmpi eq, %arg1, %c0_i32 : i32
    %1 = arith.extui %0 : i1 to i32
    %c0_i32_0 = arith.constant 0 : i32
    %2 = arith.cmpi ne, %1, %c0_i32_0 : i32
    scf.if %2 {
      %cst_13 = arith.constant 0.000000e+00 : f32
      %13 = vector.broadcast %cst_13 : f32 to vector<8x128xf32>
      %c0_14 = arith.constant 0 : index
      %c0_15 = arith.constant 0 : index
      %14 = vector.load %arg6[%c0_14, %c0_15] : memref<8x128xf32, #tpu.memory_space<vmem>>, vector<8x128xf32>
      tpu.vector_store %arg6[%c0_14, %c0_15], %13 {strides = array<i32>} : memref<8x128xf32, #tpu.memory_space<vmem>>, vector<8x128xf32>,
    } else {
    }
    %c0 = arith.constant 0 : index
    %c0_1 = arith.constant 0 : index
    %3 = vector.load %arg3[%c0, %c0_1] : memref<256x8xf32, #tpu.memory_space<vmem>>, vector<256x8xf32>
    %c0_2 = arith.constant 0 : index
    %c0_3 = arith.constant 0 : index
    %4 = vector.load %arg6[%c0_2, %c0_3] : memref<8x128xf32, #tpu.memory_space<vmem>>, vector<8x128xf32>
    %cst = arith.constant dense<0.000000e+00> : vector<256x128xf32>
    %5 = tpu.matmul %3, %4, %cst {dimension_numbers = #tpu.dot_dimension_numbers<[1], [0], [0], [1], [0, 0, 1, 1], [], []>} : vector<256x8xf32>, vector<8x128xf32>, vector<256x128xf32> -> vector<256x128xf32>
    %c0_4 = arith.constant 0 : index
    %c0_5 = arith.constant 0 : index
    %6 = vector.load %arg4[%c0_4, %c0_5] : memref<256x32xf32, #tpu.memory_space<vmem>>, vector<256x32xf32>
    %c0_6 = arith.constant 0 : index
    %c0_7 = arith.constant 0 : index
    %7 = vector.load %arg2[%c0_6, %c0_7] : memref<32x128xf32, #tpu.memory_space<vmem>>, vector<32x128xf32>
    %cst_8 = arith.constant dense<0.000000e+00> : vector<256x128xf32>
    %8 = tpu.matmul %6, %7, %cst_8 {dimension_numbers = #tpu.dot_dimension_numbers<[1], [0], [0], [1], [0, 0, 1, 1], [], []>} : vector<256x32xf32>, vector<32x128xf32>, vector<256x128xf32> -> vector<256x128xf32>
    %9 = arith.addf %5, %8 : vector<256x128xf32>
    %c0_9 = arith.constant 0 : index
    %c0_10 = arith.constant 0 : index
    %10 = vector.load %arg5[%c0_9, %c0_10] : memref<256x128xf32, #tpu.memory_space<vmem>>, vector<256x128xf32>
    tpu.vector_store %arg5[%c0_9, %c0_10], %9 {strides = array<i32>} : memref<256x128xf32, #tpu.memory_space<vmem>>, vector<256x128xf32>,
    %11 = vector.extract_strided_slice %9 {offsets = [248, 0], sizes = [8, 128], strides = [1, 1]} : vector<256x128xf32> to vector<8x128xf32>
    %c0_11 = arith.constant 0 : index
    %c0_12 = arith.constant 0 : index
    %12 = vector.load %arg6[%c0_11, %c0_12] : memref<8x128xf32, #tpu.memory_space<vmem>>, vector<8x128xf32>
    tpu.vector_store %arg6[%c0_11, %c0_12], %11 {strides = array<i32>} : memref<8x128xf32, #tpu.memory_space<vmem>>, vector<8x128xf32>,
    return
  }
  func.func @transform_0(%arg0: i32, %arg1: i32) -> (i32, i32) {
    %c0_i32 = arith.constant 0 : i32
    return %arg1, %arg0 : i32, i32
  }
  func.func @transform_1(%arg0: i32, %arg1: i32) -> (i32, i32) {
    %c0_i32 = arith.constant 0 : i32
    %c0_i32_0 = arith.constant 0 : i32
    %c0_i32_1 = arith.constant 0 : i32
    return %c0_i32, %c0_i32_0 : i32, i32
  }
  func.func @transform_2(%arg0: i32, %arg1: i32) -> (i32, i32) {
    %c0_i32 = arith.constant 0 : i32
    %c0_i32_0 = arith.constant 0 : i32
    %c0_i32_1 = arith.constant 0 : i32
    return %c0_i32, %c0_i32_0 : i32, i32
  }
  func.func @transform_3(%arg0: i32, %arg1: i32) -> (i32, i32) {
    %c0_i32 = arith.constant 0 : i32
    return %arg1, %arg0 : i32, i32
  }
}

</mosaic_0001>

<llo_original>
// kernel: tpu_custom_call.1
$region0: #{tpu_custom_call.1}
  #allocation0 [shape = 'u32[]', space=smem, size = 0x4, offset = 0x4, fixed_abs, tag = 'smem constant byte address 0x4 - core index']
  #allocation1 [shape = 'u32[144,128]{1,0:T(1,128)}', space=vmem, size = 0x12000, scoped, tag = 'internal scratch']
  #allocation2 [shape = 'f32[8,128]{1,0:T(8,128)}', space=vmem, size = 0x1000, scoped, tag = 'scratch operand']
  %s0 = inlined_call_operand.vmem [shape: f32[128,128], index: 0, kind: input, shape index: {}]
  %s1 = inlined_call_operand.vmem [shape: f32[256,8], index: 1, kind: input, shape index: {}]
  %s2 = inlined_call_operand.vmem [shape: f32[256,32], index: 2, kind: input, shape index: {}]
  %s3 = inlined_call_operand.hbm [shape: f32[1024,128], index: 3, kind: output, shape index: {}]
  %s4 = sld [smem:[#allocation0]]
  $region49: #{tpu_custom_call.1} parent=0
    _
  %s6 = ssub.s32 1, %s4
  %s7 = scalar_select 0, %s6, %s4
  $region1: #{tpu_custom_call.1} parent=0
    #allocation3 [shape = 'u8[262144]{0}', space=vmem, size = 0x40000, scoped, tag = 'output window, operand 0']
    #allocation4 [shape = 's32[2]{0}', space=sflag, size = 0x8, scoped, tag = 'scoped memory for tpu_custom_call.1']
    %8 = vsyncpa [#allocation4], 0
    %s9 = scalar_lea.sflag [#allocation4], 1
    %10 = vsyncpa %s9, 0
    loop: start=0, step=1, limit=6
    $region2: #{tpu_custom_call.1} parent=1 // loop_pre_header
      _
    $region3: #{tpu_custom_call.1} parent=1 // loop_header
      %s12 = sphi 0, %s16
      %p13 = scmp.ge.s32.totalorder %s12, 6
      %s19 = sphi 0, %s31
      %s20 = sphi 0, %s27
      %s21 = sphi 0, %s19
      %s22 = sphi 0, %s20
      %s23 = sphi 0, %s21
      %s24 = sphi 0, %s22
      %s36 = sphi 0, %s38
      %s39 = sphi 0, %s36
      %s40 = sphi 0, %s39
      %s56 = sphi 0, %s40
      %s60 = sphi 0, %s60
      %s62 = sphi 0, %s60
      %s63 = sphi 0, %s62
      %s77 = sphi 0, %s63
      %s81 = sphi 0, %s81
      %s83 = sphi 0, %s81
      %s84 = sphi 0, %s83
      %s98 = sphi 0, %s84
      %s106 = sphi 0, %s108
      %s109 = sphi 0, %s106
      %s110 = sphi 0, %s109
      %s126 = sphi 0, %s110
    $region4: #{tpu_custom_call.1} parent=1 // loop_header_branch
      %15 = sbr.rel (%p13) target = $region8
    $region5: #{tpu_custom_call.1} parent=1 // loop_body
      %s17 = ssub.s32 %s12, 1
      %s18 = ssub.s32 %s12, 2
      %s25 = sadd.s32 1, %s20
      %p26 = scmp.ge.s32.totalorder %s25, 4
      %s27 = scalar_select %p26, 0, %s25
      %s28 = sadd.s32 1, %s19
      %s29 = scalar_select %p26, %s28, %s19
      %p30 = scmp.ge.s32.totalorder %s29, 1
      %s31 = scalar_select %p30, 0, %s29
      %s32 = ssub.s32 %s20, %s27
      %s33 = ssub.s32 %s19, %s31
      %s34 = sor.u32 %s32, %s33
      %p35 = scmp.eq.s32.totalorder %s34, 0
      %s37 = sadd.s32 %s36, 1
      %s38 = scalar_select %p35, %s36, %s37
      %p41 = pneg %p35
      %p42 = scmp.eq.s32.totalorder %s12, 3
      %p43 = por %p41, %p42
      %p44 = scmp.ne.s32.totalorder %s36, %s39
      %p45 = scmp.eq.s32.totalorder %s12, 0
      %p46 = por %p44, %p45
      %p47 = scmp.ne.s32.totalorder %s36, %s39
      %p48 = scmp.eq.s32.totalorder %s17, 3
      %p49 = por %p47, %p48
      %p50 = scmp.ne.s32.totalorder %s39, %s40
      %p51 = scmp.eq.s32.totalorder %s17, 0
      %p52 = por %p50, %p51
      %p53 = scmp.ne.s32.totalorder %s39, %s40
      %p54 = scmp.eq.s32.totalorder %s18, 3
      %p55 = por %p53, %p54
      %p57 = scmp.ne.s32.totalorder %s40, %s56
      %p58 = scmp.eq.s32.totalorder %s18, 0
      %p59 = por %p57, %p58
      %s61 = sadd.s32 %s60, 1
      %p64 = scmp.eq.s32.totalorder %s12, 3
      %p65 = scmp.ne.s32.totalorder %s60, %s62
      %p66 = scmp.eq.s32.totalorder %s12, 0
      %p67 = por %p65, %p66
      %p68 = scmp.ne.s32.totalorder %s60, %s62
      %p69 = scmp.eq.s32.totalorder %s17, 3
      %p70 = por %p68, %p69
      %p71 = scmp.ne.s32.totalorder %s62, %s63
      %p72 = scmp.eq.s32.totalorder %s17, 0
      %p73 = por %p71, %p72
      %p74 = scmp.ne.s32.totalorder %s62, %s63
      %p75 = scmp.eq.s32.totalorder %s18, 3
      %p76 = por %p74, %p75
      %p78 = scmp.ne.s32.totalorder %s63, %s77
      %p79 = scmp.eq.s32.totalorder %s18, 0
      %p80 = por %p78, %p79
      %s82 = sadd.s32 %s81, 1
      %p85 = scmp.eq.s32.totalorder %s12, 3
      %p86 = scmp.ne.s32.totalorder %s81, %s83
      %p87 = scmp.eq.s32.totalorder %s12, 0
      %p88 = por %p86, %p87
      %p89 = scmp.ne.s32.totalorder %s81, %s83
      %p90 = scmp.eq.s32.totalorder %s17, 3
      %p91 = por %p89, %p90
      %p92 = scmp.ne.s32.totalorder %s83, %s84
      %p93 = scmp.eq.s32.totalorder %s17, 0
      %p94 = por %p92, %p93
      %p95 = scmp.ne.s32.totalorder %s83, %s84
      %p96 = scmp.eq.s32.totalorder %s18, 3
      %p97 = por %p95, %p96
      %p99 = scmp.ne.s32.totalorder %s84, %s98
      %p100 = scmp.eq.s32.totalorder %s18, 0
      %p101 = por %p99, %p100
      %s102 = ssub.s32 %s20, %s27
      %s103 = ssub.s32 %s19, %s31
      %s104 = sor.u32 %s102, %s103
      %p105 = scmp.eq.s32.totalorder %s104, 0
      %s107 = sadd.s32 %s106, 1
      %s108 = scalar_select %p105, %s106, %s107
      %p111 = pneg %p105
      %p112 = scmp.eq.s32.totalorder %s12, 3
      %p113 = por %p111, %p112
      %p114 = scmp.ne.s32.totalorder %s106, %s109
      %p115 = scmp.eq.s32.totalorder %s12, 0
      %p116 = por %p114, %p115
      %p117 = scmp.ne.s32.totalorder %s106, %s109
      %p118 = scmp.eq.s32.totalorder %s17, 3
      %p119 = por %p117, %p118
      %p120 = scmp.ne.s32.totalorder %s109, %s110
      %p121 = scmp.eq.s32.totalorder %s17, 0
      %p122 = por %p120, %p121
      %p123 = scmp.ne.s32.totalorder %s109, %s110
      %p124 = scmp.eq.s32.totalorder %s18, 3
      %p125 = por %p123, %p124
      %p127 = scmp.ne.s32.totalorder %s110, %s126
      %p128 = scmp.eq.s32.totalorder %s18, 0
      %p129 = por %p127, %p128
      %p130 = scmp.le.s32.totalorder 1, %s12
      %p131 = scmp.lt.s32.totalorder %s12, 5
      %p132 = pnand %p130, %p131
      %p133 = pneg %p132
      // Predicated region
      $region9: #{tpu_custom_call.1} parent=5 // pred_check
        _
      $region10: #{tpu_custom_call.1} parent=5 // pred_check_branch
        %135 = sbr.rel (%p132) target = $region12
      $region11: #{tpu_custom_call.1} parent=5 // pred_region
        %s136 = ssub.s32 %s12, 1
        // Predicated region
        $region13: #{tpu_custom_call.1} parent=11 // pred_check
          %p137 = pneg %p73
        $region14: #{tpu_custom_call.1} parent=11 // pred_check_branch
          %139 = sbr.rel (%p137) target = $region16
        $region15: #{tpu_custom_call.1} parent=11 // pred_region
          _
        $region16: #{tpu_custom_call.1} parent=11 // pred_fallthru
          _
        // Predicated region
        $region17: #{tpu_custom_call.1} parent=11 // pred_check
          %p140 = pneg %p94
        $region18: #{tpu_custom_call.1} parent=11 // pred_check_branch
          %142 = sbr.rel (%p140) target = $region20
        $region19: #{tpu_custom_call.1} parent=11 // pred_region
          _
        $region20: #{tpu_custom_call.1} parent=11 // pred_fallthru
          _
      $region12: #{tpu_custom_call.1} parent=5 // pred_fallthru
        _
      %p143 = scmp.lt.s32.totalorder %s12, 4
      // Predicated region
      $region21: #{tpu_custom_call.1} parent=5 // pred_check
        %p144 = pneg %p143
      $region22: #{tpu_custom_call.1} parent=5 // pred_check_branch
        %146 = sbr.rel (%p144) target = $region24
      $region23: #{tpu_custom_call.1} parent=5 // pred_region
        // Predicated region
        $region25: #{tpu_custom_call.1} parent=23 // pred_check
          %p147 = pneg %p46
        $region26: #{tpu_custom_call.1} parent=23 // pred_check_branch
          %149 = sbr.rel (%p147) target = $region28
        $region27: #{tpu_custom_call.1} parent=23 // pred_region
          %s150 = smul.u32 4, %s20
          %p151 = scmp.lt.s32.totalorder %s150, 15
          %s152 = scalar_select %p151, %s150, 15
          %p153 = scmp.lt.s32.totalorder %s19, 0
          %s154 = scalar_select %p153, %s19, 0
          %s155 = sadd.s32 %s154, %s152
          %s156 = smul.addr %s155, 8
          %s157 = scalar_lea.vmem %s0, %s156
          %s158 = smul.u32 4, %s20
        $region28: #{tpu_custom_call.1} parent=23 // pred_fallthru
          _
      $region24: #{tpu_custom_call.1} parent=5 // pred_fallthru
        _
      %p159 = scmp.le.s32.totalorder 1, %s12
      %p160 = scmp.lt.s32.totalorder %s12, 5
      %p161 = pnand %p159, %p160
      %p162 = pneg %p161
      // Predicated region
      $region29: #{tpu_custom_call.1} parent=5 // pred_check
        _
      $region30: #{tpu_custom_call.1} parent=5 // pred_check_branch
        %164 = sbr.rel (%p161) target = $region32
      $region31: #{tpu_custom_call.1} parent=5 // pred_region
        %s165 = ssub.s32 %s12, 1
        %s166 = smul.u32 4, %s22
        %p167 = scmp.lt.s32.totalorder %s166, 15
        %s168 = scalar_select %p167, %s166, 15
        %p169 = scmp.lt.s32.totalorder %s21, 0
        %s170 = scalar_select %p169, %s21, 0
        %s171 = sadd.s32 %s170, %s168
        %s172 = smul.addr %s171, 8
        %s173 = scalar_lea.vmem %s0, %s172
        %p174 = pneg %p52
        %p175 = pneg %p49
        %p176 = pneg %p73
        %p177 = pneg %p70
        %p178 = pneg %p94
        %p179 = pneg %p91
        %p180 = pneg %p122
        %p181 = pneg %p119
        %s182 = sand.u32 %s109, 1
        %s183 = scalar_lea.sflag [#allocation4], %s182
        %s184 = sand.u32 %s109, 1
        %s185 = smul.addr %s184, 256
        %s186 = scalar_lea.vmem [#allocation3], %s185
        %s187 = smul.u32 4, %s22
        %p188 = scmp.lt.s32.totalorder %s187, 15
        %s189 = scalar_select %p188, %s187, 15
        %p190 = scmp.lt.s32.totalorder %s21, 0
        %s191 = scalar_select %p190, %s21, 0
        %s192 = sadd.s32 %s191, %s189
        %s193 = smul.addr %s192, 8
        %s194 = scalar_lea.vmem %s0, %s193
        %s195 = smul.u32 4, %s22
        %s196 = smul.u32 32, %s22
        %p197 = scmp.eq.s32.totalorder %s22, 0
        // Predicated region
        $region33: #{tpu_custom_call.1} parent=31 // pred_check
          %p198 = pneg %p197
        $region34: #{tpu_custom_call.1} parent=31 // pred_check_branch
          %200 = sbr.rel (%p198) target = $region36
        $region35: #{tpu_custom_call.1} parent=31 // pred_region
          %201 = vst [vmem:[#allocation2] sm:$0xff] 0.0
        $region36: #{tpu_custom_call.1} parent=31 // pred_fallthru
          _
        %v202 = vld [vmem:[%s1] sm:$0xff]
        %v203 = vld [vmem:[%s1 + $0x8] sm:$0xff]
        %v204 = vld [vmem:[%s1 + $0x10] sm:$0xff]
        %v205 = vld [vmem:[%s1 + $0x18] sm:$0xff]
        %v206 = vld [vmem:[%s1 + $0x20] sm:$0xff]
        %v207 = vld [vmem:[%s1 + $0x28] sm:$0xff]
        %v208 = vld [vmem:[%s1 + $0x30] sm:$0xff]
        %v209 = vld [vmem:[%s1 + $0x38] sm:$0xff]
        %v210 = vld [vmem:[%s1 + $0x40] sm:$0xff]
        %v211 = vld [vmem:[%s1 + $0x48] sm:$0xff]
        %v212 = vld [vmem:[%s1 + $0x50] sm:$0xff]
        %v213 = vld [vmem:[%s1 + $0x58] sm:$0xff]
        %v214 = vld [vmem:[%s1 + $0x60] sm:$0xff]
        %v215 = vld [vmem:[%s1 + $0x68] sm:$0xff]
        %v216 = vld [vmem:[%s1 + $0x70] sm:$0xff]
        %v217 = vld [vmem:[%s1 + $0x78] sm:$0xff]
        %v218 = vld [vmem:[%s1 + $0x80] sm:$0xff]
        %v219 = vld [vmem:[%s1 + $0x88] sm:$0xff]
        %v220 = vld [vmem:[%s1 + $0x90] sm:$0xff]
        %v221 = vld [vmem:[%s1 + $0x98] sm:$0xff]
        %v222 = vld [vmem:[%s1 + $0xa0] sm:$0xff]
        %v223 = vld [vmem:[%s1 + $0xa8] sm:$0xff]
        %v224 = vld [vmem:[%s1 + $0xb0] sm:$0xff]
        %v225 = vld [vmem:[%s1 + $0xb8] sm:$0xff]
        %v226 = vld [vmem:[%s1 + $0xc0] sm:$0xff]
        %v227 = vld [vmem:[%s1 + $0xc8] sm:$0xff]
        %v228 = vld [vmem:[%s1 + $0xd0] sm:$0xff]
        %v229 = vld [vmem:[%s1 + $0xd8] sm:$0xff]
        %v230 = vld [vmem:[%s1 + $0xe0] sm:$0xff]
        %v231 = vld [vmem:[%s1 + $0xe8] sm:$0xff]
        %v232 = vld [vmem:[%s1 + $0xf0] sm:$0xff]
        %v233 = vld [vmem:[%s1 + $0xf8] sm:$0xff]
        %v234 = vld [vmem:[#allocation2] sm:$0xff]
        %v235 = vld [vmem:[%s2] sm:$0xff]
        %v236 = vld [vmem:[%s2 + $0x8] sm:$0xff]
        %v237 = vld [vmem:[%s2 + $0x10] sm:$0xff]
        %v238 = vld [vmem:[%s2 + $0x18] sm:$0xff]
        %v239 = vld [vmem:[%s2 + $0x20] sm:$0xff]
        %v240 = vld [vmem:[%s2 + $0x28] sm:$0xff]
        %v241 = vld [vmem:[%s2 + $0x30] sm:$0xff]
        %v242 = vld [vmem:[%s2 + $0x38] sm:$0xff]
        %v243 = vld [vmem:[%s2 + $0x40] sm:$0xff]
        %v244 = vld [vmem:[%s2 + $0x48] sm:$0xff]
        %v245 = vld [vmem:[%s2 + $0x50] sm:$0xff]
        %v246 = vld [vmem:[%s2 + $0x58] sm:$0xff]
        %v247 = vld [vmem:[%s2 + $0x60] sm:$0xff]
        %v248 = vld [vmem:[%s2 + $0x68] sm:$0xff]
        %v249 = vld [vmem:[%s2 + $0x70] sm:$0xff]
        %v250 = vld [vmem:[%s2 + $0x78] sm:$0xff]
        %v251 = vld [vmem:[%s2 + $0x80] sm:$0xff]
        %v252 = vld [vmem:[%s2 + $0x88] sm:$0xff]
        %v253 = vld [vmem:[%s2 + $0x90] sm:$0xff]
        %v254 = vld [vmem:[%s2 + $0x98] sm:$0xff]
        %v255 = vld [vmem:[%s2 + $0xa0] sm:$0xff]
        %v256 = vld [vmem:[%s2 + $0xa8] sm:$0xff]
        %v257 = vld [vmem:[%s2 + $0xb0] sm:$0xff]
        %v258 = vld [vmem:[%s2 + $0xb8] sm:$0xff]
        %v259 = vld [vmem:[%s2 + $0xc0] sm:$0xff]
        %v260 = vld [vmem:[%s2 + $0xc8] sm:$0xff]
        %v261 = vld [vmem:[%s2 + $0xd0] sm:$0xff]
        %v262 = vld [vmem:[%s2 + $0xd8] sm:$0xff]
        %v263 = vld [vmem:[%s2 + $0xe0] sm:$0xff]
        %v264 = vld [vmem:[%s2 + $0xe8] sm:$0xff]
        %v265 = vld [vmem:[%s2 + $0xf0] sm:$0xff]
        %v266 = vld [vmem:[%s2 + $0xf8] sm:$0xff]
        %v267 = vld [vmem:[%s194] sm:$0xff]
        %v268 = vld [vmem:[%s194 + $0x8] sm:$0xff]
        %v269 = vld [vmem:[%s194 + $0x10] sm:$0xff]
        %v270 = vld [vmem:[%s194 + $0x18] sm:$0xff]
        %vm271 = vcmask 261120
        %v273 = vsel %vm271, %v235, 0
        %v276 = vsel %vm271, %v236, 0
        %v279 = vsel %vm271, %v237, 0
        %v282 = vsel %vm271, %v238, 0
        %v285 = vsel %vm271, %v239, 0
        %v288 = vsel %vm271, %v240, 0
        %v291 = vsel %vm271, %v241, 0
        %v294 = vsel %vm271, %v242, 0
        %v297 = vsel %vm271, %v243, 0
        %v300 = vsel %vm271, %v244, 0
        %v303 = vsel %vm271, %v245, 0
        %v306 = vsel %vm271, %v246, 0
        %v309 = vsel %vm271, %v247, 0
        %v312 = vsel %vm271, %v248, 0
        %v315 = vsel %vm271, %v249, 0
        %v318 = vsel %vm271, %v250, 0
        %v321 = vsel %vm271, %v251, 0
        %v324 = vsel %vm271, %v252, 0
        %v327 = vsel %vm271, %v253, 0
        %v330 = vsel %vm271, %v254, 0
        %v333 = vsel %vm271, %v255, 0
        %v336 = vsel %vm271, %v256, 0
        %v339 = vsel %vm271, %v257, 0
        %v342 = vsel %vm271, %v258, 0
        %v345 = vsel %vm271, %v259, 0
        %v348 = vsel %vm271, %v260, 0
        %v351 = vsel %vm271, %v261, 0
        %v354 = vsel %vm271, %v262, 0
        %v357 = vsel %vm271, %v263, 0
        %v360 = vsel %vm271, %v264, 0
        %v363 = vsel %vm271, %v265, 0
        %v366 = vsel %vm271, %v266, 0
        %368 = vmatprep.subr.mxu0 0.0
        %369 = vmatpush1.msra.mxu0 %v267
        %370 = vmatprep.subr.mxu0 0.0
        %371 = vmatpush1.msra.mxu0 %v268
        %372 = vmatprep.subr.mxu0 0.0
        %373 = vmatpush1.msra.mxu0 %v269
        %374 = vmatprep.subr.mxu0 0.0
        %375 = vmatpush1.msra.mxu0 %v270
        %376 = vmatprep.subr.mxu0 0.0
        %377 = vmatpush1.msra.mxu0 0.0
        %378 = vmatprep.subr.mxu0 0.0
        %379 = vmatpush1.msra.mxu0 0.0
        %380 = vmatprep.subr.mxu0 0.0
        %381 = vmatpush1.msra.mxu0 0.0
        %382 = vmatprep.subr.mxu0 0.0
        %383 = vmatpush1.msra.mxu0 0.0
        %384 = vmatprep.subr.mxu0 0.0
        %385 = vmatpush1.msra.mxu0 0.0
        %386 = vmatprep.subr.mxu0 0.0
        %387 = vmatpush1.msra.mxu0 0.0
        %388 = vmatprep.subr.mxu0 0.0
        %389 = vmatpush1.msra.mxu0 0.0
        %390 = vmatprep.subr.mxu0 0.0
        %391 = vmatpush1.msra.mxu0 0.0
        %392 = vmatprep.subr.mxu0 0.0
        %393 = vmatpush1.msra.mxu0 0.0
        %394 = vmatprep.subr.mxu0 0.0
        %395 = vmatpush1.msra.mxu0 0.0
        %396 = vmatprep.subr.mxu0 0.0
        %397 = vmatpush1.msra.mxu0 0.0
        %398 = vmatprep.subr.mxu0 0.0
        %399 = vmatpush1.msra.mxu0 0.0
        %400 = vmatprep.subr.mxu0 0.0
        %401 = vmatpush1.msra.mxu0 0.0
        %402 = vmatprep.subr.mxu0 0.0
        %403 = vmatpush1.msra.mxu0 0.0
        %404 = vmatprep.subr.mxu0 0.0
        %405 = vmatpush1.msra.mxu0 0.0
        %406 = vmatprep.subr.mxu0 0.0
        %407 = vmatpush1.msra.mxu0 0.0
        %408 = vmatprep.subr.mxu0 0.0
        %409 = vmatpush1.msra.mxu0 0.0
        %410 = vmatprep.subr.mxu0 0.0
        %411 = vmatpush1.msra.mxu0 0.0
        %412 = vmatprep.subr.mxu0 0.0
        %413 = vmatpush1.msra.mxu0 0.0
        %414 = vmatprep.subr.mxu0 0.0
        %415 = vmatpush1.msra.mxu0 0.0
        %416 = vmatprep.subr.mxu0 0.0
        %417 = vmatpush1.msra.mxu0 0.0
        %418 = vmatprep.subr.mxu0 0.0
        %419 = vmatpush1.msra.mxu0 0.0
        %420 = vmatprep.subr.mxu0 0.0
        %421 = vmatpush1.msra.mxu0 0.0
        %422 = vmatprep.subr.mxu0 0.0
        %423 = vmatpush1.msra.mxu0 0.0
        %424 = vmatprep.subr.mxu0 0.0
        %425 = vmatpush1.msra.mxu0 0.0
        %426 = vmatprep.subr.mxu0 0.0
        %427 = vmatpush1.msra.mxu0 0.0
        %428 = vmatprep.subr.mxu0 0.0
        %429 = vmatpush1.msra.mxu0 0.0
        %430 = vmatprep.subr.mxu0 0.0
        %431 = vmatpush1.msra.mxu0 0.0
        %432 = vmatprep.mubr.f32.mxu0 0.0
        %433 = vmatmul.mubr.f32.gmra.mrb[0].mxu0 %v273
        %v434 = vpop.f32.mrb[0].mxu0
        %v435 = vadd.f32 0.0, %v434
        %v436 = vpop.f32.mrb[0].mxu0
        %437 = vmatprep.mubr.f32.mxu0 0.0
        %438 = vmatmul.mubr.f32.gmra.mrb[0].mxu0 %v276
        %v439 = vpop.f32.mrb[0].mxu0
        %v440 = vadd.f32 0.0, %v439
        %v441 = vpop.f32.mrb[0].mxu0
        %442 = vmatprep.mubr.f32.mxu0 0.0
        %443 = vmatmul.mubr.f32.gmra.mrb[0].mxu0 %v279
        %v444 = vpop.f32.mrb[0].mxu0
        %v445 = vadd.f32 0.0, %v444
        %v446 = vpop.f32.mrb[0].mxu0
        %447 = vmatprep.mubr.f32.mxu0 0.0
        %448 = vmatmul.mubr.f32.gmra.mrb[0].mxu0 %v282
        %v449 = vpop.f32.mrb[0].mxu0
        %v450 = vadd.f32 0.0, %v449
        %v451 = vpop.f32.mrb[0].mxu0
        %452 = vmatprep.mubr.f32.mxu0 0.0
        %453 = vmatmul.mubr.f32.gmra.mrb[0].mxu0 %v285
        %v454 = vpop.f32.mrb[0].mxu0
        %v455 = vadd.f32 0.0, %v454
        %v456 = vpop.f32.mrb[0].mxu0
        %457 = vmatprep.mubr.f32.mxu0 0.0
        %458 = vmatmul.mubr.f32.gmra.mrb[0].mxu0 %v288
        %v459 = vpop.f32.mrb[0].mxu0
        %v460 = vadd.f32 0.0, %v459
        %v461 = vpop.f32.mrb[0].mxu0
        %462 = vmatprep.mubr.f32.mxu0 0.0
        %463 = vmatmul.mubr.f32.gmra.mrb[0].mxu0 %v291
        %v464 = vpop.f32.mrb[0].mxu0
        %v465 = vadd.f32 0.0, %v464
        %v466 = vpop.f32.mrb[0].mxu0
        %467 = vmatprep.mubr.f32.mxu0 0.0
        %468 = vmatmul.mubr.f32.gmra.mrb[0].mxu0 %v294
        %v469 = vpop.f32.mrb[0].mxu0
        %v470 = vadd.f32 0.0, %v469
        %v471 = vpop.f32.mrb[0].mxu0
        %472 = vmatprep.mubr.f32.mxu0 0.0
        %473 = vmatmul.mubr.f32.gmra.mrb[0].mxu0 %v297
        %v474 = vpop.f32.mrb[0].mxu0
        %v475 = vadd.f32 0.0, %v474
        %v476 = vpop.f32.mrb[0].mxu0
        %477 = vmatprep.mubr.f32.mxu0 0.0
        %478 = vmatmul.mubr.f32.gmra.mrb[0].mxu0 %v300
        %v479 = vpop.f32.mrb[0].mxu0
        %v480 = vadd.f32 0.0, %v479
        %v481 = vpop.f32.mrb[0].mxu0
        %482 = vmatprep.mubr.f32.mxu0 0.0
        %483 = vmatmul.mubr.f32.gmra.mrb[0].mxu0 %v303
        %v484 = vpop.f32.mrb[0].mxu0
        %v485 = vadd.f32 0.0, %v484
        %v486 = vpop.f32.mrb[0].mxu0
        %487 = vmatprep.mubr.f32.mxu0 0.0
        %488 = vmatmul.mubr.f32.gmra.mrb[0].mxu0 %v306
        %v489 = vpop.f32.mrb[0].mxu0
        %v490 = vadd.f32 0.0, %v489
        %v491 = vpop.f32.mrb[0].mxu0
        %492 = vmatprep.mubr.f32.mxu0 0.0
        %493 = vmatmul.mubr.f32.gmra.mrb[0].mxu0 %v309
        %v494 = vpop.f32.mrb[0].mxu0
        %v495 = vadd.f32 0.0, %v494
        %v496 = vpop.f32.mrb[0].mxu0
        %497 = vmatprep.mubr.f32.mxu0 0.0
        %498 = vmatmul.mubr.f32.gmra.mrb[0].mxu0 %v312
        %v499 = vpop.f32.mrb[0].mxu0
        %v500 = vadd.f32 0.0, %v499
        %v501 = vpop.f32.mrb[0].mxu0
        %502 = vmatprep.mubr.f32.mxu0 0.0
        %503 = vmatmul.mubr.f32.gmra.mrb[0].mxu0 %v315
        %v504 = vpop.f32.mrb[0].mxu0
        %v505 = vadd.f32 0.0, %v504
        %v506 = vpop.f32.mrb[0].mxu0
        %507 = vmatprep.mubr.f32.mxu0 0.0
        %508 = vmatmul.mubr.f32.gmra.mrb[0].mxu0 %v318
        %v509 = vpop.f32.mrb[0].mxu0
        %v510 = vadd.f32 0.0, %v509
        %v511 = vpop.f32.mrb[0].mxu0
        %512 = vmatprep.mubr.f32.mxu0 0.0
        %513 = vmatmul.mubr.f32.gmra.mrb[0].mxu0 %v321
        %v514 = vpop.f32.mrb[0].mxu0
        %v515 = vadd.f32 0.0, %v514
        %v516 = vpop.f32.mrb[0].mxu0
        %517 = vmatprep.mubr.f32.mxu0 0.0
        %518 = vmatmul.mubr.f32.gmra.mrb[0].mxu0 %v324
        %v519 = vpop.f32.mrb[0].mxu0
        %v520 = vadd.f32 0.0, %v519
        %v521 = vpop.f32.mrb[0].mxu0
        %522 = vmatprep.mubr.f32.mxu0 0.0
        %523 = vmatmul.mubr.f32.gmra.mrb[0].mxu0 %v327
        %v524 = vpop.f32.mrb[0].mxu0
        %v525 = vadd.f32 0.0, %v524
        %v526 = vpop.f32.mrb[0].mxu0
        %527 = vmatprep.mubr.f32.mxu0 0.0
        %528 = vmatmul.mubr.f32.gmra.mrb[0].mxu0 %v330
        %v529 = vpop.f32.mrb[0].mxu0
        %v530 = vadd.f32 0.0, %v529
        %v531 = vpop.f32.mrb[0].mxu0
        %532 = vmatprep.mubr.f32.mxu0 0.0
        %533 = vmatmul.mubr.f32.gmra.mrb[0].mxu0 %v333
        %v534 = vpop.f32.mrb[0].mxu0
        %v535 = vadd.f32 0.0, %v534
        %v536 = vpop.f32.mrb[0].mxu0
        %537 = vmatprep.mubr.f32.mxu0 0.0
        %538 = vmatmul.mubr.f32.gmra.mrb[0].mxu0 %v336
        %v539 = vpop.f32.mrb[0].mxu0
        %v540 = vadd.f32 0.0, %v539
        %v541 = vpop.f32.mrb[0].mxu0
        %542 = vmatprep.mubr.f32.mxu0 0.0
        %543 = vmatmul.mubr.f32.gmra.mrb[0].mxu0 %v339
        %v544 = vpop.f32.mrb[0].mxu0
        %v545 = vadd.f32 0.0, %v544
        %v546 = vpop.f32.mrb[0].mxu0
        %547 = vmatprep.mubr.f32.mxu0 0.0
        %548 = vmatmul.mubr.f32.gmra.mrb[0].mxu0 %v342
        %v549 = vpop.f32.mrb[0].mxu0
        %v550 = vadd.f32 0.0, %v549
        %v551 = vpop.f32.mrb[0].mxu0
        %552 = vmatprep.mubr.f32.mxu0 0.0
        %553 = vmatmul.mubr.f32.gmra.mrb[0].mxu0 %v345
        %v554 = vpop.f32.mrb[0].mxu0
        %v555 = vadd.f32 0.0, %v554
        %v556 = vpop.f32.mrb[0].mxu0
        %557 = vmatprep.mubr.f32.mxu0 0.0
        %558 = vmatmul.mubr.f32.gmra.mrb[0].mxu0 %v348
        %v559 = vpop.f32.mrb[0].mxu0
        %v560 = vadd.f32 0.0, %v559
        %v561 = vpop.f32.mrb[0].mxu0
        %562 = vmatprep.mubr.f32.mxu0 0.0
        %563 = vmatmul.mubr.f32.gmra.mrb[0].mxu0 %v351
        %v564 = vpop.f32.mrb[0].mxu0
        %v565 = vadd.f32 0.0, %v564
        %v566 = vpop.f32.mrb[0].mxu0
        %567 = vmatprep.mubr.f32.mxu0 0.0
        %568 = vmatmul.mubr.f32.gmra.mrb[0].mxu0 %v354
        %v569 = vpop.f32.mrb[0].mxu0
        %v570 = vadd.f32 0.0, %v569
        %v571 = vpop.f32.mrb[0].mxu0
        %572 = vmatprep.mubr.f32.mxu0 0.0
        %573 = vmatmul.mubr.f32.gmra.mrb[0].mxu0 %v357
        %v574 = vpop.f32.mrb[0].mxu0
        %v575 = vadd.f32 0.0, %v574
        %v576 = vpop.f32.mrb[0].mxu0
        %577 = vmatprep.mubr.f32.mxu0 0.0
        %578 = vmatmul.mubr.f32.gmra.mrb[0].mxu0 %v360
        %v579 = vpop.f32.mrb[0].mxu0
        %v580 = vadd.f32 0.0, %v579
        %v581 = vpop.f32.mrb[0].mxu0
        %582 = vmatprep.mubr.f32.mxu0 0.0
        %583 = vmatmul.mubr.f32.gmra.mrb[0].mxu0 %v363
        %v584 = vpop.f32.mrb[0].mxu0
        %v585 = vadd.f32 0.0, %v584
        %v586 = vpop.f32.mrb[0].mxu0
        %587 = vmatprep.mubr.f32.mxu0 0.0
        %588 = vmatmul.mubr.f32.gmra.mrb[0].mxu0 %v366
        %v589 = vpop.f32.mrb[0].mxu0
        %v590 = vadd.f32 0.0, %v589
        %v591 = vpop.f32.mrb[0].mxu0
        %592 = vdwg.mxu0
        %vm593 = vcmask 64512
        %v595 = vsel %vm593, %v202, 0
        %v598 = vsel %vm593, %v203, 0
        %v601 = vsel %vm593, %v204, 0
        %v604 = vsel %vm593, %v205, 0
        %v607 = vsel %vm593, %v206, 0
        %v610 = vsel %vm593, %v207, 0
        %v613 = vsel %vm593, %v208, 0
        %v616 = vsel %vm593, %v209, 0
        %v619 = vsel %vm593, %v210, 0
        %v622 = vsel %vm593, %v211, 0
        %v625 = vsel %vm593, %v212, 0
        %v628 = vsel %vm593, %v213, 0
        %v631 = vsel %vm593, %v214, 0
        %v634 = vsel %vm593, %v215, 0
        %v637 = vsel %vm593, %v216, 0
        %v640 = vsel %vm593, %v217, 0
        %v643 = vsel %vm593, %v218, 0
        %v646 = vsel %vm593, %v219, 0
        %v649 = vsel %vm593, %v220, 0
        %v652 = vsel %vm593, %v221, 0
        %v655 = vsel %vm593, %v222, 0
        %v658 = vsel %vm593, %v223, 0
        %v661 = vsel %vm593, %v224, 0
        %v664 = vsel %vm593, %v225, 0
        %v667 = vsel %vm593, %v226, 0
        %v670 = vsel %vm593, %v227, 0
        %v673 = vsel %vm593, %v228, 0
        %v676 = vsel %vm593, %v229, 0
        %v679 = vsel %vm593, %v230, 0
        %v682 = vsel %vm593, %v231, 0
        %v685 = vsel %vm593, %v232, 0
        %v688 = vsel %vm593, %v233, 0
        %690 = vmatprep.subr.mxu0 0.0
        %691 = vmatpush1.msra.mxu0 %v234
        %692 = vmatprep.subr.mxu0 0.0
        %693 = vmatpush1.msra.mxu0 0.0
        %694 = vmatprep.subr.mxu0 0.0
        %695 = vmatpush1.msra.mxu0 0.0
        %696 = vmatprep.subr.mxu0 0.0
        %697 = vmatpush1.msra.mxu0 0.0
        %698 = vmatprep.subr.mxu0 0.0
        %699 = vmatpush1.msra.mxu0 0.0
        %700 = vmatprep.subr.mxu0 0.0
        %701 = vmatpush1.msra.mxu0 0.0
        %702 = vmatprep.subr.mxu0 0.0
        %703 = vmatpush1.msra.mxu0 0.0
        %704 = vmatprep.subr.mxu0 0.0
        %705 = vmatpush1.msra.mxu0 0.0
        %706 = vmatprep.subr.mxu0 0.0
        %707 = vmatpush1.msra.mxu0 0.0
        %708 = vmatprep.subr.mxu0 0.0
        %709 = vmatpush1.msra.mxu0 0.0
        %710 = vmatprep.subr.mxu0 0.0
        %711 = vmatpush1.msra.mxu0 0.0
        %712 = vmatprep.subr.mxu0 0.0
        %713 = vmatpush1.msra.mxu0 0.0
        %714 = vmatprep.subr.mxu0 0.0
        %715 = vmatpush1.msra.mxu0 0.0
        %716 = vmatprep.subr.mxu0 0.0
        %717 = vmatpush1.msra.mxu0 0.0
        %718 = vmatprep.subr.mxu0 0.0
        %719 = vmatpush1.msra.mxu0 0.0
        %720 = vmatprep.subr.mxu0 0.0
        %721 = vmatpush1.msra.mxu0 0.0
        %722 = vmatprep.subr.mxu0 0.0
        %723 = vmatpush1.msra.mxu0 0.0
        %724 = vmatprep.subr.mxu0 0.0
        %725 = vmatpush1.msra.mxu0 0.0
        %726 = vmatprep.subr.mxu0 0.0
        %727 = vmatpush1.msra.mxu0 0.0
        %728 = vmatprep.subr.mxu0 0.0
        %729 = vmatpush1.msra.mxu0 0.0
        %730 = vmatprep.subr.mxu0 0.0
        %731 = vmatpush1.msra.mxu0 0.0
        %732 = vmatprep.subr.mxu0 0.0
        %733 = vmatpush1.msra.mxu0 0.0
        %734 = vmatprep.subr.mxu0 0.0
        %735 = vmatpush1.msra.mxu0 0.0
        %736 = vmatprep.subr.mxu0 0.0
        %737 = vmatpush1.msra.mxu0 0.0
        %738 = vmatprep.subr.mxu0 0.0
        %739 = vmatpush1.msra.mxu0 0.0
        %740 = vmatprep.subr.mxu0 0.0
        %741 = vmatpush1.msra.mxu0 0.0
        %742 = vmatprep.subr.mxu0 0.0
        %743 = vmatpush1.msra.mxu0 0.0
        %744 = vmatprep.subr.mxu0 0.0
        %745 = vmatpush1.msra.mxu0 0.0
        %746 = vmatprep.subr.mxu0 0.0
        %747 = vmatpush1.msra.mxu0 0.0
        %748 = vmatprep.subr.mxu0 0.0
        %749 = vmatpush1.msra.mxu0 0.0
        %750 = vmatprep.subr.mxu0 0.0
        %751 = vmatpush1.msra.mxu0 0.0
        %752 = vmatprep.subr.mxu0 0.0
        %753 = vmatpush1.msra.mxu0 0.0
        %754 = vmatprep.mubr.f32.mxu0 0.0
        %755 = vmatmul.mubr.f32.gmra.mrb[0].mxu0 %v595
        %v756 = vpop.f32.mrb[0].mxu0
        %v757 = vadd.f32 %v435, %v756
        %v758 = vpop.f32.mrb[0].mxu0
        %759 = vmatprep.mubr.f32.mxu0 0.0
        %760 = vmatmul.mubr.f32.gmra.mrb[0].mxu0 %v598
        %v761 = vpop.f32.mrb[0].mxu0
        %v762 = vadd.f32 %v440, %v761
        %v763 = vpop.f32.mrb[0].mxu0
        %764 = vmatprep.mubr.f32.mxu0 0.0
        %765 = vmatmul.mubr.f32.gmra.mrb[0].mxu0 %v601
        %v766 = vpop.f32.mrb[0].mxu0
        %v767 = vadd.f32 %v445, %v766
        %v768 = vpop.f32.mrb[0].mxu0
        %769 = vmatprep.mubr.f32.mxu0 0.0
        %770 = vmatmul.mubr.f32.gmra.mrb[0].mxu0 %v604
        %v771 = vpop.f32.mrb[0].mxu0
        %v772 = vadd.f32 %v450, %v771
        %v773 = vpop.f32.mrb[0].mxu0
        %774 = vmatprep.mubr.f32.mxu0 0.0
        %775 = vmatmul.mubr.f32.gmra.mrb[0].mxu0 %v607
        %v776 = vpop.f32.mrb[0].mxu0
        %v777 = vadd.f32 %v455, %v776
        %v778 = vpop.f32.mrb[0].mxu0
        %779 = vmatprep.mubr.f32.mxu0 0.0
        %780 = vmatmul.mubr.f32.gmra.mrb[0].mxu0 %v610
        %v781 = vpop.f32.mrb[0].mxu0
        %v782 = vadd.f32 %v460, %v781
        %v783 = vpop.f32.mrb[0].mxu0
        %784 = vmatprep.mubr.f32.mxu0 0.0
        %785 = vmatmul.mubr.f32.gmra.mrb[0].mxu0 %v613
        %v786 = vpop.f32.mrb[0].mxu0
        %v787 = vadd.f32 %v465, %v786
        %v788 = vpop.f32.mrb[0].mxu0
        %789 = vmatprep.mubr.f32.mxu0 0.0
        %790 = vmatmul.mubr.f32.gmra.mrb[0].mxu0 %v616
        %v791 = vpop.f32.mrb[0].mxu0
        %v792 = vadd.f32 %v470, %v791
        %v793 = vpop.f32.mrb[0].mxu0
        %794 = vmatprep.mubr.f32.mxu0 0.0
        %795 = vmatmul.mubr.f32.gmra.mrb[0].mxu0 %v619
        %v796 = vpop.f32.mrb[0].mxu0
        %v797 = vadd.f32 %v475, %v796
        %v798 = vpop.f32.mrb[0].mxu0
        %799 = vmatprep.mubr.f32.mxu0 0.0
        %800 = vmatmul.mubr.f32.gmra.mrb[0].mxu0 %v622
        %v801 = vpop.f32.mrb[0].mxu0
        %v802 = vadd.f32 %v480, %v801
        %v803 = vpop.f32.mrb[0].mxu0
        %804 = vmatprep.mubr.f32.mxu0 0.0
        %805 = vmatmul.mubr.f32.gmra.mrb[0].mxu0 %v625
        %v806 = vpop.f32.mrb[0].mxu0
        %v807 = vadd.f32 %v485, %v806
        %v808 = vpop.f32.mrb[0].mxu0
        %809 = vmatprep.mubr.f32.mxu0 0.0
        %810 = vmatmul.mubr.f32.gmra.mrb[0].mxu0 %v628
        %v811 = vpop.f32.mrb[0].mxu0
        %v812 = vadd.f32 %v490, %v811
        %v813 = vpop.f32.mrb[0].mxu0
        %814 = vmatprep.mubr.f32.mxu0 0.0
        %815 = vmatmul.mubr.f32.gmra.mrb[0].mxu0 %v631
        %v816 = vpop.f32.mrb[0].mxu0
        %v817 = vadd.f32 %v495, %v816
        %v818 = vpop.f32.mrb[0].mxu0
        %819 = vmatprep.mubr.f32.mxu0 0.0
        %820 = vmatmul.mubr.f32.gmra.mrb[0].mxu0 %v634
        %v821 = vpop.f32.mrb[0].mxu0
        %v822 = vadd.f32 %v500, %v821
        %v823 = vpop.f32.mrb[0].mxu0
        %824 = vmatprep.mubr.f32.mxu0 0.0
        %825 = vmatmul.mubr.f32.gmra.mrb[0].mxu0 %v637
        %v826 = vpop.f32.mrb[0].mxu0
        %v827 = vadd.f32 %v505, %v826
        %v828 = vpop.f32.mrb[0].mxu0
        %829 = vmatprep.mubr.f32.mxu0 0.0
        %830 = vmatmul.mubr.f32.gmra.mrb[0].mxu0 %v640
        %v831 = vpop.f32.mrb[0].mxu0
        %v832 = vadd.f32 %v510, %v831
        %v833 = vpop.f32.mrb[0].mxu0
        %834 = vmatprep.mubr.f32.mxu0 0.0
        %835 = vmatmul.mubr.f32.gmra.mrb[0].mxu0 %v643
        %v836 = vpop.f32.mrb[0].mxu0
        %v837 = vadd.f32 %v515, %v836
        %v838 = vpop.f32.mrb[0].mxu0
        %839 = vmatprep.mubr.f32.mxu0 0.0
        %840 = vmatmul.mubr.f32.gmra.mrb[0].mxu0 %v646
        %v841 = vpop.f32.mrb[0].mxu0
        %v842 = vadd.f32 %v520, %v841
        %v843 = vpop.f32.mrb[0].mxu0
        %844 = vmatprep.mubr.f32.mxu0 0.0
        %845 = vmatmul.mubr.f32.gmra.mrb[0].mxu0 %v649
        %v846 = vpop.f32.mrb[0].mxu0
        %v847 = vadd.f32 %v525, %v846
        %v848 = vpop.f32.mrb[0].mxu0
        %849 = vmatprep.mubr.f32.mxu0 0.0
        %850 = vmatmul.mubr.f32.gmra.mrb[0].mxu0 %v652
        %v851 = vpop.f32.mrb[0].mxu0
        %v852 = vadd.f32 %v530, %v851
        %v853 = vpop.f32.mrb[0].mxu0
        %854 = vmatprep.mubr.f32.mxu0 0.0
        %855 = vmatmul.mubr.f32.gmra.mrb[0].mxu0 %v655
        %v856 = vpop.f32.mrb[0].mxu0
        %v857 = vadd.f32 %v535, %v856
        %v858 = vpop.f32.mrb[0].mxu0
        %859 = vmatprep.mubr.f32.mxu0 0.0
        %860 = vmatmul.mubr.f32.gmra.mrb[0].mxu0 %v658
        %v861 = vpop.f32.mrb[0].mxu0
        %v862 = vadd.f32 %v540, %v861
        %v863 = vpop.f32.mrb[0].mxu0
        %864 = vmatprep.mubr.f32.mxu0 0.0
        %865 = vmatmul.mubr.f32.gmra.mrb[0].mxu0 %v661
        %v866 = vpop.f32.mrb[0].mxu0
        %v867 = vadd.f32 %v545, %v866
        %v868 = vpop.f32.mrb[0].mxu0
        %869 = vmatprep.mubr.f32.mxu0 0.0
        %870 = vmatmul.mubr.f32.gmra.mrb[0].mxu0 %v664
        %v871 = vpop.f32.mrb[0].mxu0
        %v872 = vadd.f32 %v550, %v871
        %v873 = vpop.f32.mrb[0].mxu0
        %874 = vmatprep.mubr.f32.mxu0 0.0
        %875 = vmatmul.mubr.f32.gmra.mrb[0].mxu0 %v667
        %v876 = vpop.f32.mrb[0].mxu0
        %v877 = vadd.f32 %v555, %v876
        %v878 = vpop.f32.mrb[0].mxu0
        %879 = vmatprep.mubr.f32.mxu0 0.0
        %880 = vmatmul.mubr.f32.gmra.mrb[0].mxu0 %v670
        %v881 = vpop.f32.mrb[0].mxu0
        %v882 = vadd.f32 %v560, %v881
        %v883 = vpop.f32.mrb[0].mxu0
        %884 = vmatprep.mubr.f32.mxu0 0.0
        %885 = vmatmul.mubr.f32.gmra.mrb[0].mxu0 %v673
        %v886 = vpop.f32.mrb[0].mxu0
        %v887 = vadd.f32 %v565, %v886
        %v888 = vpop.f32.mrb[0].mxu0
        %889 = vmatprep.mubr.f32.mxu0 0.0
        %890 = vmatmul.mubr.f32.gmra.mrb[0].mxu0 %v676
        %v891 = vpop.f32.mrb[0].mxu0
        %v892 = vadd.f32 %v570, %v891
        %v893 = vpop.f32.mrb[0].mxu0
        %894 = vmatprep.mubr.f32.mxu0 0.0
        %895 = vmatmul.mubr.f32.gmra.mrb[0].mxu0 %v679
        %v896 = vpop.f32.mrb[0].mxu0
        %v897 = vadd.f32 %v575, %v896
        %v898 = vpop.f32.mrb[0].mxu0
        %899 = vmatprep.mubr.f32.mxu0 0.0
        %900 = vmatmul.mubr.f32.gmra.mrb[0].mxu0 %v682
        %v901 = vpop.f32.mrb[0].mxu0
        %v902 = vadd.f32 %v580, %v901
        %v903 = vpop.f32.mrb[0].mxu0
        %904 = vmatprep.mubr.f32.mxu0 0.0
        %905 = vmatmul.mubr.f32.gmra.mrb[0].mxu0 %v685
        %v906 = vpop.f32.mrb[0].mxu0
        %v907 = vadd.f32 %v585, %v906
        %v908 = vpop.f32.mrb[0].mxu0
        %909 = vmatprep.mubr.f32.mxu0 0.0
        %910 = vmatmul.mubr.f32.gmra.mrb[0].mxu0 %v688
        %v911 = vpop.f32.mrb[0].mxu0
        %v912 = vadd.f32 %v590, %v911
        %v913 = vpop.f32.mrb[0].mxu0
        %914 = vdwg.mxu0
        %915 = vst [vmem:[%s186] sm:$0xff] %v757
        %916 = vst [vmem:[%s186 + $0x8] sm:$0xff] %v762
        %917 = vst [vmem:[%s186 + $0x10] sm:$0xff] %v767
        %918 = vst [vmem:[%s186 + $0x18] sm:$0xff] %v772
        %919 = vst [vmem:[%s186 + $0x20] sm:$0xff] %v777
        %920 = vst [vmem:[%s186 + $0x28] sm:$0xff] %v782
        %921 = vst [vmem:[%s186 + $0x30] sm:$0xff] %v787
        %922 = vst [vmem:[%s186 + $0x38] sm:$0xff] %v792
        %923 = vst [vmem:[%s186 + $0x40] sm:$0xff] %v797
        %924 = vst [vmem:[%s186 + $0x48] sm:$0xff] %v802
        %925 = vst [vmem:[%s186 + $0x50] sm:$0xff] %v807
        %926 = vst [vmem:[%s186 + $0x58] sm:$0xff] %v812
        %927 = vst [vmem:[%s186 + $0x60] sm:$0xff] %v817
        %928 = vst [vmem:[%s186 + $0x68] sm:$0xff] %v822
        %929 = vst [vmem:[%s186 + $0x70] sm:$0xff] %v827
        %930 = vst [vmem:[%s186 + $0x78] sm:$0xff] %v832
        %931 = vst [vmem:[%s186 + $0x80] sm:$0xff] %v837
        %932 = vst [vmem:[%s186 + $0x88] sm:$0xff] %v842
        %933 = vst [vmem:[%s186 + $0x90] sm:$0xff] %v847
        %934 = vst [vmem:[%s186 + $0x98] sm:$0xff] %v852
        %935 = vst [vmem:[%s186 + $0xa0] sm:$0xff] %v857
        %936 = vst [vmem:[%s186 + $0xa8] sm:$0xff] %v862
        %937 = vst [vmem:[%s186 + $0xb0] sm:$0xff] %v867
        %938 = vst [vmem:[%s186 + $0xb8] sm:$0xff] %v872
        %939 = vst [vmem:[%s186 + $0xc0] sm:$0xff] %v877
        %940 = vst [vmem:[%s186 + $0xc8] sm:$0xff] %v882
        %941 = vst [vmem:[%s186 + $0xd0] sm:$0xff] %v887
        %942 = vst [vmem:[%s186 + $0xd8] sm:$0xff] %v892
        %943 = vst [vmem:[%s186 + $0xe0] sm:$0xff] %v897
        %944 = vst [vmem:[%s186 + $0xe8] sm:$0xff] %v902
        %945 = vst [vmem:[%s186 + $0xf0] sm:$0xff] %v907
        %946 = vst [vmem:[%s186 + $0xf8] sm:$0xff] %v912
        %947 = vst [vmem:[#allocation2] sm:$0xff] %v912
        %s948 = sand.u32 %s109, 1
        %s949 = scalar_lea.sflag [#allocation4], %s948
        %s950 = sand.u32 %s109, 1
        %s951 = smul.addr %s950, 256
        %s952 = scalar_lea.vmem [#allocation3], %s951
        // Predicated region
        $region37: #{tpu_custom_call.1} parent=31 // pred_check
          %p953 = pneg %p119
        $region38: #{tpu_custom_call.1} parent=31 // pred_check_branch
          %955 = sbr.rel (%p953) target = $region40
        $region39: #{tpu_custom_call.1} parent=31 // pred_region
          %s956 = smul.u32 32, %s22
          %s958 = ssub.s32 4096, 4096
          %959 = vsyncadd %s949, %s958
          %s960 = sadd.s32 %s21, %s956
          %s961 = smul.addr %s960, 128
          %s962 = scalar_lea.hbm %s3, %s961
          %s963 = sshll.u32 %s952, 4
          %s964 = int_to_ptr.vmem [resolvable:$true] %s963
          %969 = dma.vmem_to_hbm [thread:$0]  %s964, 4096, %s962, %s949, 128, 128, 8
        $region40: #{tpu_custom_call.1} parent=31 // pred_fallthru
          _
      $region32: #{tpu_custom_call.1} parent=5 // pred_fallthru
        _
      %p970 = scmp.le.s32.totalorder 2, %s12
      // Predicated region
      $region41: #{tpu_custom_call.1} parent=5 // pred_check
        %p971 = pneg %p970
      $region42: #{tpu_custom_call.1} parent=5 // pred_check_branch
        %973 = sbr.rel (%p971) target = $region44
      $region43: #{tpu_custom_call.1} parent=5 // pred_region
        %s974 = ssub.s32 %s12, 2
        // Predicated region
        $region45: #{tpu_custom_call.1} parent=43 // pred_check
          %p975 = pneg %p125
        $region46: #{tpu_custom_call.1} parent=43 // pred_check_branch
          %977 = sbr.rel (%p975) target = $region48
        $region47: #{tpu_custom_call.1} parent=43 // pred_region
          %s978 = sand.u32 %s110, 1
          %s979 = scalar_lea.sflag [#allocation4], %s978
          %s980 = sand.u32 %s110, 1
          %s981 = smul.addr %s980, 256
          %s982 = scalar_lea.vmem [#allocation3], %s981
          %983 = dma.done %s979, 4096
        $region48: #{tpu_custom_call.1} parent=43 // pred_fallthru
          _
      $region44: #{tpu_custom_call.1} parent=5 // pred_fallthru
        _
    $region6: #{tpu_custom_call.1} parent=1 // loop_footer
      %s16 = sadd.s32 1, %s12
    $region7: #{tpu_custom_call.1} parent=1 // loop_footer_branch
      %11 = sbr.rel target = $region3
    $region8: #{tpu_custom_call.1} parent=1 // loop_exit
      _
    %984 = vsyncpa [#allocation4], 1
    %s985 = scalar_lea.sflag [#allocation4], 1
    %986 = vsyncpa %s985, 1

</llo_original>
